<compile_context>
chip_gen: v7x
topology: tpu7x:2x2x1
jax: 0.10.0
libtpu: 0.0.40
codegen_flags: <defaults>
</compile_context>

<pallas_src>
import functools

import numpy as np
import jax
import jax.numpy as jnp
from jax.experimental import pallas as pl
from jax.experimental.pallas import tpu as pltpu

# ----------------------------- configuration ------------------------------
B = 2             # batch
C_IN = 4          # input channels
H = W = 16        # spatial
HW = H * W        # 256 -> lane axis (2 x 128 lanes, dense)
HIDDEN = 32       # hidden channels of the synthetic backbone
NUM_CLASSES = 8   # leaf classes of the decision tree
DEPTH = NUM_CLASSES.bit_length() - 1   # complete binary tree depth (= 3)
OUT_LANES = 128   # lane-dense one-hot output, sliced to NUM_CLASSES in wrapper

assert 2 ** DEPTH == NUM_CLASSES


# ------------------------- fused forward kernel ----------------------------
def nbdt_fused_kernel(x_ref, w1t_ref, pool_ref, w2t_ref, b2_ref, out_ref, *,
                      num_classes, depth):
    """One grid step == one batch sample.  Backbone + hard decision rules."""
    # ---- backbone: 1x1 conv (channel mix) + ReLU + GAP + FC classifier ----
    x_b = x_ref[0]                                       # [C_IN, HW], HW on lanes
    h = jnp.maximum(
        jnp.dot(w1t_ref[...], x_b,
                preferred_element_type=jnp.float32), 0.0)        # [HIDDEN, HW]
    # Global average pool as an MXU matmul against a 1/HW column (keeps the
    # XLU free for the rules-phase max reductions).
    pooled = jnp.dot(h, pool_ref[...],
                     preferred_element_type=jnp.float32)         # [HIDDEN, 1]
    logits = (jnp.dot(w2t_ref[...], pooled,
                      preferred_element_type=jnp.float32)
              + b2_ref[...])                                     # [C, 1]

    # ---- HardEmbeddedDecisionRules: hard walk of the class hierarchy ------
    # The hierarchy is a complete binary tree whose node subtrees are
    # contiguous class ranges [lo, lo + width).  Each child's node logit is
    # the max backbone logit over that child's range (get_node_logits); the
    # walk follows the argmax child (ties -> first/left child), exactly as
    # traverse_tree does, but computed only along the taken path.
    ci = jax.lax.broadcasted_iota(jnp.int32, (num_classes, 1), 0)   # class ids
    neg = jnp.float32(-1e30)      # masks are never empty -> sentinel is safe
    lo = jnp.zeros((1, 1), jnp.int32)
    width = num_classes
    for _ in range(depth):        # depth=3; switch to lax.fori_loop if it grows
        half = width // 2
        mid = lo + half
        hi = lo + width
        left = jnp.max(jnp.where((ci >= lo) & (ci < mid), logits, neg),
                       axis=0, keepdims=True)                    # [1, 1]
        right = jnp.max(jnp.where((ci >= mid) & (ci < hi), logits, neg),
                        axis=0, keepdims=True)                   # [1, 1]
        go_right = (right > left).astype(jnp.int32)   # strict -> left wins ties
        lo = lo + go_right * half
        width = half
    pred = lo                                          # [1, 1] predicted class

    # predicted_to_logits: one-hot row, written as a full 128-lane store.
    lane = jax.lax.broadcasted_iota(jnp.int32, (1, out_ref.shape[-1]), 1)
    out_ref[...] = (lane == pred).astype(out_ref.dtype)[None]


# ------------------------------- wrapper -----------------------------------
def nbdt_forward(x_nchw, w1, w2, b2):
    """NBDT.forward: backbone + hard embedded decision rules (fused kernel)."""
    bsz, cin, hh, ww = x_nchw.shape
    hw = hh * ww
    hidden = w1.shape[1]
    num_classes = w2.shape[1]

    # Free layout plumbing in the wrapper (never inside the kernel):
    x = x_nchw.reshape(bsz, cin, hw)          # channels-first, spatial on lanes
    w1t = w1.T                                 # [HIDDEN, C_IN]
    w2t = w2.T                                 # [C, HIDDEN]
    b2c = b2.reshape(num_classes, 1)           # [C, 1]
    pool = jnp.full((hw, 1), 1.0 / hw, jnp.float32)   # GAP as a matmul

    kernel = functools.partial(nbdt_fused_kernel,
                               num_classes=num_classes, depth=DEPTH)
    out_padded = pl.pallas_call(
        kernel,
        out_shape=jax.ShapeDtypeStruct((bsz, 1, OUT_LANES), jnp.float32),
        grid=(bsz,),
        in_specs=[
            pl.BlockSpec((1, cin, hw), lambda b: (b, 0, 0)),        # x (per sample)
            pl.BlockSpec((hidden, cin), lambda b: (0, 0)),          # w1^T (resident)
            pl.BlockSpec((hw, 1), lambda b: (0, 0)),                # pooling column
            pl.BlockSpec((num_classes, hidden), lambda b: (0, 0)),  # w2^T
            pl.BlockSpec((num_classes, 1), lambda b: (0, 0)),       # bias column
        ],
        out_specs=pl.BlockSpec((1, 1, OUT_LANES), lambda b: (b, 0, 0)),
        compiler_params=pltpu.CompilerParams(
            dimension_semantics=("parallel",)),   # v7x: shard batch over 2 TCs
        # TODO(synk): at real backbone sizes, tile the HW axis via BlockSpec
        # and set vmem_limit_bytes (halve tiles for v7x's 64 MiB VMEM); cast
        # x/w1/w2 to bf16 for the matmuls for extra MXU/HBM headroom.
    )(x, w1t, pool, w2t, b2c)

    # Slice the lane padding off outside the kernel (lane-dense store inside).
    return out_padded[:, 0, :num_classes]


# ------------------------------ reference ----------------------------------
def reference_forward(x_nchw, w1, w2, b2):
    """Plain numpy mirror of the backbone + HardEmbeddedDecisionRules walk."""
    x_flat = np.asarray(x_nchw, np.float32).reshape(B, C_IN, HW)
    h = np.maximum(np.einsum('bcs,ch->bhs', x_flat, np.asarray(w1)), 0.0)
    pooled = h.mean(axis=2)                                  # [B, HIDDEN]
    logits = pooled @ np.asarray(w2) + np.asarray(b2)        # [B, C]

    out = np.zeros((B, NUM_CLASSES), np.float32)
    for b in range(B):
        lo, width = 0, NUM_CLASSES
        for _ in range(DEPTH):                 # tree walk, node = range [lo, lo+width)
            half = width // 2
            left = logits[b, lo:lo + half].max()             # get_node_logits
            right = logits[b, lo + half:lo + width].max()
            if right > left:                   # argmax child; first child wins ties
                lo += half
            width = half
        out[b, lo] = 1.0                       # predicted_to_logits (one-hot)
    return out


# --------------------------------- main -------------------------------------
if __name__ == "__main__":
    key = jax.random.PRNGKey(0)
    kx, k1, k2, kb = jax.random.split(key, 4)

    # PyTorch-style NCHW input.
    x_nchw = jax.random.normal(kx, (B, C_IN, H, W), jnp.float32)

    # Deterministic synthetic backbone parameters.
    # TODO(synk): real NBDT loads an induced hierarchy from graph/wnid files
    # and a pretrained checkpoint (host-side setup); arbitrary non-contiguous
    # class groupings would need per-node class-range tables instead of the
    # complete-binary-tree ranges used here.
    w1 = jax.random.normal(k1, (C_IN, HIDDEN), jnp.float32) * 0.1
    w2 = jax.random.normal(k2, (HIDDEN, NUM_CLASSES), jnp.float32) * 0.1
    b2 = jax.random.normal(kb, (1, NUM_CLASSES), jnp.float32) * 0.1

    out = nbdt_forward(x_nchw, w1, w2, b2)
    out = jax.block_until_ready(out)

    ref = reference_forward(x_nchw, w1, w2, b2)
    assert out.shape == (B, NUM_CLASSES)
    assert np.array_equal(np.asarray(out), ref), (np.asarray(out), ref)

    print("KERNEL_OK")
</pallas_src>

<mosaic_0001>
module attributes {stable_mosaic.version = 11 : i64} {
  func.func @nbdt_fused_kernel(%arg0: i32, %arg1: memref<1x4x256xf32, #tpu.memory_space<vmem>>, %arg2: memref<32x4xf32, #tpu.memory_space<vmem>>, %arg3: memref<256x1xf32, #tpu.memory_space<vmem>>, %arg4: memref<8x32xf32, #tpu.memory_space<vmem>>, %arg5: memref<8x1xf32, #tpu.memory_space<vmem>>, %arg6: memref<1x1x128xf32, #tpu.memory_space<vmem>>) attributes {dimension_semantics = [#tpu.dimension_semantics<parallel>], iteration_bounds = array<i64: 2>, scalar_prefetch = 0 : i64, scratch_operands = 0 : i64, tpu.core_type = #tpu.core_type<tc>, window_params = [{transform_indices = @transform_0, window_bounds = array<i64: 1, 4, 256>}, {pipeline_mode = #tpu.pipeline_mode<synchronous>, transform_indices = @transform_1, window_bounds = array<i64: 32, 4>}, {pipeline_mode = #tpu.pipeline_mode<synchronous>, transform_indices = @transform_2, window_bounds = array<i64: 256, 1>}, {pipeline_mode = #tpu.pipeline_mode<synchronous>, transform_indices = @transform_3, window_bounds = array<i64: 8, 32>}, {pipeline_mode = #tpu.pipeline_mode<synchronous>, transform_indices = @transform_4, window_bounds = array<i64: 8, 1>}, {transform_indices = @transform_5, window_bounds = array<i64: 1, 1, 128>}]} {
    %c0 = arith.constant 0 : index
    %c0_0 = arith.constant 0 : index
    %c0_1 = arith.constant 0 : index
    %0 = vector.load %arg1[%c0, %c0_0, %c0_1] : memref<1x4x256xf32, #tpu.memory_space<vmem>>, vector<1x4x256xf32>
    %1 = vector.shape_cast %0 : vector<1x4x256xf32> to vector<4x256xf32>
    %c0_2 = arith.constant 0 : index
    %c0_3 = arith.constant 0 : index
    %2 = vector.load %arg2[%c0_2, %c0_3] : memref<32x4xf32, #tpu.memory_space<vmem>>, vector<32x4xf32>
    %cst = arith.constant dense<0.000000e+00> : vector<32x256xf32>
    %3 = tpu.matmul %2, %1, %cst {dimension_numbers = #tpu.dot_dimension_numbers<[1], [0], [0], [1], [0, 0, 1, 1], [], []>} : vector<32x4xf32>, vector<4x256xf32>, vector<32x256xf32> -> vector<32x256xf32>
    %cst_4 = arith.constant 0.000000e+00 : f32
    %4 = vector.broadcast %cst_4 : f32 to vector<32x256xf32>
    %5 = arith.maximumf %3, %4 : vector<32x256xf32>
    %c0_5 = arith.constant 0 : index
    %c0_6 = arith.constant 0 : index
    %6 = vector.load %arg3[%c0_5, %c0_6] : memref<256x1xf32, #tpu.memory_space<vmem>>, vector<256x1xf32>
    %cst_7 = arith.constant dense<0.000000e+00> : vector<32x1xf32>
    %7 = tpu.matmul %5, %6, %cst_7 {dimension_numbers = #tpu.dot_dimension_numbers<[1], [0], [0], [1], [0, 0, 1, 1], [], []>} : vector<32x256xf32>, vector<256x1xf32>, vector<32x1xf32> -> vector<32x1xf32>
    %c0_8 = arith.constant 0 : index
    %c0_9 = arith.constant 0 : index
    %8 = vector.load %arg4[%c0_8, %c0_9] : memref<8x32xf32, #tpu.memory_space<vmem>>, vector<8x32xf32>
    %cst_10 = arith.constant dense<0.000000e+00> : vector<8x1xf32>
    %9 = tpu.matmul %8, %7, %cst_10 {dimension_numbers = #tpu.dot_dimension_numbers<[1], [0], [0], [1], [0, 0, 1, 1], [], []>} : vector<8x32xf32>, vector<32x1xf32>, vector<8x1xf32> -> vector<8x1xf32>
    %c0_11 = arith.constant 0 : index
    %c0_12 = arith.constant 0 : index
    %10 = vector.load %arg5[%c0_11, %c0_12] : memref<8x1xf32, #tpu.memory_space<vmem>>, vector<8x1xf32>
    %11 = arith.addf %9, %10 : vector<8x1xf32>
    %12 = tpu.iota {dimensions = array<i32: 0>} : vector<8x1xi32>
    %c0_i32 = arith.constant 0 : i32
    %13 = vector.broadcast %c0_i32 : i32 to vector<1x1xi32>
    %c4_i32 = arith.constant 4 : i32
    %14 = vector.broadcast %c4_i32 : i32 to vector<1x1xi32>
    %15 = arith.addi %13, %14 : vector<1x1xi32>
    %c8_i32 = arith.constant 8 : i32
    %16 = vector.broadcast %c8_i32 : i32 to vector<1x1xi32>
    %17 = arith.addi %13, %16 : vector<1x1xi32>
    %18 = vector.broadcast %13 : vector<1x1xi32> to vector<8x1xi32>
    %19 = arith.cmpi sge, %12, %18 : vector<8x1xi32>
    %20 = vector.broadcast %15 : vector<1x1xi32> to vector<8x1xi32>
    %21 = arith.cmpi slt, %12, %20 : vector<8x1xi32>
    %22 = arith.andi %19, %21 : vector<8x1xi1>
    %cst_13 = arith.constant -1.000000e+30 : f32
    %23 = vector.broadcast %cst_13 : f32 to vector<8x1xf32>
    %24 = arith.select %22, %11, %23 : vector<8x1xi1>, vector<8x1xf32>
    %cst_14 = arith.constant dense<0xFF800000> : vector<1xf32>
    %25 = vector.multi_reduction <maximumf>, %24, %cst_14 [0] : vector<8x1xf32> to vector<1xf32>
    %26 = vector.shape_cast %25 : vector<1xf32> to vector<1x1xf32>
    %27 = vector.broadcast %15 : vector<1x1xi32> to vector<8x1xi32>
    %28 = arith.cmpi sge, %12, %27 : vector<8x1xi32>
    %29 = vector.broadcast %17 : vector<1x1xi32> to vector<8x1xi32>
    %30 = arith.cmpi slt, %12, %29 : vector<8x1xi32>
    %31 = arith.andi %28, %30 : vector<8x1xi1>
    %cst_15 = arith.constant -1.000000e+30 : f32
    %32 = vector.broadcast %cst_15 : f32 to vector<8x1xf32>
    %33 = arith.select %31, %11, %32 : vector<8x1xi1>, vector<8x1xf32>
    %cst_16 = arith.constant dense<0xFF800000> : vector<1xf32>
    %34 = vector.multi_reduction <maximumf>, %33, %cst_16 [0] : vector<8x1xf32> to vector<1xf32>
    %35 = vector.shape_cast %34 : vector<1xf32> to vector<1x1xf32>
    %36 = arith.cmpf ogt, %35, %26 : vector<1x1xf32>
    %37 = arith.extui %36 : vector<1x1xi1> to vector<1x1xi32>
    %c4_i32_17 = arith.constant 4 : i32
    %38 = vector.broadcast %c4_i32_17 : i32 to vector<1x1xi32>
    %39 = arith.muli %37, %38 : vector<1x1xi32>
    %40 = arith.addi %13, %39 : vector<1x1xi32>
    %c2_i32 = arith.constant 2 : i32
    %41 = vector.broadcast %c2_i32 : i32 to vector<1x1xi32>
    %42 = arith.addi %40, %41 : vector<1x1xi32>
    %c4_i32_18 = arith.constant 4 : i32
    %43 = vector.broadcast %c4_i32_18 : i32 to vector<1x1xi32>
    %44 = arith.addi %40, %43 : vector<1x1xi32>
    %45 = vector.broadcast %40 : vector<1x1xi32> to vector<8x1xi32>
    %46 = arith.cmpi sge, %12, %45 : vector<8x1xi32>
    %47 = vector.broadcast %42 : vector<1x1xi32> to vector<8x1xi32>
    %48 = arith.cmpi slt, %12, %47 : vector<8x1xi32>
    %49 = arith.andi %46, %48 : vector<8x1xi1>
    %cst_19 = arith.constant -1.000000e+30 : f32
    %50 = vector.broadcast %cst_19 : f32 to vector<8x1xf32>
    %51 = arith.select %49, %11, %50 : vector<8x1xi1>, vector<8x1xf32>
    %cst_20 = arith.constant dense<0xFF800000> : vector<1xf32>
    %52 = vector.multi_reduction <maximumf>, %51, %cst_20 [0] : vector<8x1xf32> to vector<1xf32>
    %53 = vector.shape_cast %52 : vector<1xf32> to vector<1x1xf32>
    %54 = vector.broadcast %42 : vector<1x1xi32> to vector<8x1xi32>
    %55 = arith.cmpi sge, %12, %54 : vector<8x1xi32>
    %56 = vector.broadcast %44 : vector<1x1xi32> to vector<8x1xi32>
    %57 = arith.cmpi slt, %12, %56 : vector<8x1xi32>
    %58 = arith.andi %55, %57 : vector<8x1xi1>
    %cst_21 = arith.constant -1.000000e+30 : f32
    %59 = vector.broadcast %cst_21 : f32 to vector<8x1xf32>
    %60 = arith.select %58, %11, %59 : vector<8x1xi1>, vector<8x1xf32>
    %cst_22 = arith.constant dense<0xFF800000> : vector<1xf32>
    %61 = vector.multi_reduction <maximumf>, %60, %cst_22 [0] : vector<8x1xf32> to vector<1xf32>
    %62 = vector.shape_cast %61 : vector<1xf32> to vector<1x1xf32>
    %63 = arith.cmpf ogt, %62, %53 : vector<1x1xf32>
    %64 = arith.extui %63 : vector<1x1xi1> to vector<1x1xi32>
    %c2_i32_23 = arith.constant 2 : i32
    %65 = vector.broadcast %c2_i32_23 : i32 to vector<1x1xi32>
    %66 = arith.muli %64, %65 : vector<1x1xi32>
    %67 = arith.addi %40, %66 : vector<1x1xi32>
    %c1_i32 = arith.constant 1 : i32
    %68 = vector.broadcast %c1_i32 : i32 to vector<1x1xi32>
    %69 = arith.addi %67, %68 : vector<1x1xi32>
    %c2_i32_24 = arith.constant 2 : i32
    %70 = vector.broadcast %c2_i32_24 : i32 to vector<1x1xi32>
    %71 = arith.addi %67, %70 : vector<1x1xi32>
    %72 = vector.broadcast %67 : vector<1x1xi32> to vector<8x1xi32>
    %73 = arith.cmpi sge, %12, %72 : vector<8x1xi32>
    %74 = vector.broadcast %69 : vector<1x1xi32> to vector<8x1xi32>
    %75 = arith.cmpi slt, %12, %74 : vector<8x1xi32>
    %76 = arith.andi %73, %75 : vector<8x1xi1>
    %cst_25 = arith.constant -1.000000e+30 : f32
    %77 = vector.broadcast %cst_25 : f32 to vector<8x1xf32>
    %78 = arith.select %76, %11, %77 : vector<8x1xi1>, vector<8x1xf32>
    %cst_26 = arith.constant dense<0xFF800000> : vector<1xf32>
    %79 = vector.multi_reduction <maximumf>, %78, %cst_26 [0] : vector<8x1xf32> to vector<1xf32>
    %80 = vector.shape_cast %79 : vector<1xf32> to vector<1x1xf32>
    %81 = vector.broadcast %69 : vector<1x1xi32> to vector<8x1xi32>
    %82 = arith.cmpi sge, %12, %81 : vector<8x1xi32>
    %83 = vector.broadcast %71 : vector<1x1xi32> to vector<8x1xi32>
    %84 = arith.cmpi slt, %12, %83 : vector<8x1xi32>
    %85 = arith.andi %82, %84 : vector<8x1xi1>
    %cst_27 = arith.constant -1.000000e+30 : f32
    %86 = vector.broadcast %cst_27 : f32 to vector<8x1xf32>
    %87 = arith.select %85, %11, %86 : vector<8x1xi1>, vector<8x1xf32>
    %cst_28 = arith.constant dense<0xFF800000> : vector<1xf32>
    %88 = vector.multi_reduction <maximumf>, %87, %cst_28 [0] : vector<8x1xf32> to vector<1xf32>
    %89 = vector.shape_cast %88 : vector<1xf32> to vector<1x1xf32>
    %90 = arith.cmpf ogt, %89, %80 : vector<1x1xf32>
    %91 = arith.extui %90 : vector<1x1xi1> to vector<1x1xi32>
    %c1_i32_29 = arith.constant 1 : i32
    %92 = vector.broadcast %c1_i32_29 : i32 to vector<1x1xi32>
    %93 = arith.muli %91, %92 : vector<1x1xi32>
    %94 = arith.addi %67, %93 : vector<1x1xi32>
    %95 = tpu.iota {dimensions = array<i32: 1>} : vector<1x128xi32>
    %96 = vector.broadcast %94 : vector<1x1xi32> to vector<1x128xi32>
    %97 = arith.cmpi eq, %95, %96 : vector<1x128xi32>
    %98 = arith.extui %97 : vector<1x128xi1> to vector<1x128xi32>
    %99 = arith.sitofp %98 : vector<1x128xi32> to vector<1x128xf32>
    %100 = vector.shape_cast %99 : vector<1x128xf32> to vector<1x1x128xf32>
    %c0_30 = arith.constant 0 : index
    %c0_31 = arith.constant 0 : index
    %c0_32 = arith.constant 0 : index
    %101 = vector.load %arg6[%c0_30, %c0_31, %c0_32] : memref<1x1x128xf32, #tpu.memory_space<vmem>>, vector<1x1x128xf32>
    tpu.vector_store %arg6[%c0_30, %c0_31, %c0_32], %100 {strides = array<i32>} : memref<1x1x128xf32, #tpu.memory_space<vmem>>, vector<1x1x128xf32>,
    return
  }
  func.func @transform_0(%arg0: i32) -> (i32, i32, i32) {
    %c0_i32 = arith.constant 0 : i32
    %c0_i32_0 = arith.constant 0 : i32
    %c0_i32_1 = arith.constant 0 : i32
    return %arg0, %c0_i32, %c0_i32_0 : i32, i32, i32
  }
  func.func @transform_1(%arg0: i32) -> (i32, i32) {
    %c0_i32 = arith.constant 0 : i32
    %c0_i32_0 = arith.constant 0 : i32
    %c0_i32_1 = arith.constant 0 : i32
    return %c0_i32, %c0_i32_0 : i32, i32
  }
  func.func @transform_2(%arg0: i32) -> (i32, i32) {
    %c0_i32 = arith.constant 0 : i32
    %c0_i32_0 = arith.constant 0 : i32
    %c0_i32_1 = arith.constant 0 : i32
    return %c0_i32, %c0_i32_0 : i32, i32
  }
  func.func @transform_3(%arg0: i32) -> (i32, i32) {
    %c0_i32 = arith.constant 0 : i32
    %c0_i32_0 = arith.constant 0 : i32
    %c0_i32_1 = arith.constant 0 : i32
    return %c0_i32, %c0_i32_0 : i32, i32
  }
  func.func @transform_4(%arg0: i32) -> (i32, i32) {
    %c0_i32 = arith.constant 0 : i32
    %c0_i32_0 = arith.constant 0 : i32
    %c0_i32_1 = arith.constant 0 : i32
    return %c0_i32, %c0_i32_0 : i32, i32
  }
  func.func @transform_5(%arg0: i32) -> (i32, i32, i32) {
    %c0_i32 = arith.constant 0 : i32
    %c0_i32_0 = arith.constant 0 : i32
    %c0_i32_1 = arith.constant 0 : i32
    return %arg0, %c0_i32, %c0_i32_0 : i32, i32, i32
  }
}

</mosaic_0001>

<llo_original>
// kernel: tpu_custom_call.1
$region0: #{tpu_custom_call.1}
  #allocation0 [shape = 'u32[]', space=smem, size = 0x4, offset = 0x4, fixed_abs, tag = 'smem constant byte address 0x4 - core index']
  #allocation1 [shape = 'u32[144,128]{1,0:T(1,128)}', space=vmem, size = 0x12000, scoped, tag = 'internal scratch']
  %s0 = inlined_call_operand.vmem [shape: f32[2,4,256], index: 0, kind: input, shape index: {}]
  %s1 = inlined_call_operand.vmem [shape: f32[32,4], index: 1, kind: input, shape index: {}]
  %s2 = inlined_call_operand.vmem [shape: f32[256,1], index: 2, kind: input, shape index: {}]
  %s3 = inlined_call_operand.vmem [shape: f32[8,32], index: 3, kind: input, shape index: {}]
  %s4 = inlined_call_operand.vmem [shape: f32[8,1], index: 4, kind: input, shape index: {}]
  %s5 = inlined_call_operand.hbm [shape: f32[2,1,128], index: 5, kind: output, shape index: {}]
  %s6 = sld [smem:[#allocation0]]
  $region53: #{tpu_custom_call.1} parent=0
    _
  %s8 = ssub.s32 1, %s6
  %s9 = scalar_select 0, %s8, %s6
  $region1: #{tpu_custom_call.1} parent=0
    #allocation2 [shape = 'u8[1024]{0}', space=vmem, size = 0x400, scoped, tag = 'output window, operand 0']
    #allocation3 [shape = 's32[2]{0}', space=sflag, size = 0x8, scoped, tag = 'scoped memory for tpu_custom_call.1']
    %10 = vsyncpa [#allocation3], 0
    %s11 = scalar_lea.sflag [#allocation3], 1
    %12 = vsyncpa %s11, 0
    loop: start=0, step=1, limit=4
    $region2: #{tpu_custom_call.1} parent=1 // loop_pre_header
      _
    $region3: #{tpu_custom_call.1} parent=1 // loop_header
      %s14 = sphi 0, %s18
      %p15 = scmp.ge.s32.totalorder %s14, 4
      %s24 = sphi 0, %s26
      %s27 = sphi 0, %s24
      %s28 = sphi 0, %s27
      %s44 = sphi 0, %s28
      %s48 = sphi 0, %s48
      %s50 = sphi 0, %s48
      %s51 = sphi 0, %s50
      %s65 = sphi 0, %s51
      %s69 = sphi 0, %s69
      %s71 = sphi 0, %s69
      %s72 = sphi 0, %s71
      %s86 = sphi 0, %s72
      %s90 = sphi 0, %s90
      %s92 = sphi 0, %s90
      %s93 = sphi 0, %s92
      %s107 = sphi 0, %s93
      %s111 = sphi 0, %s111
      %s113 = sphi 0, %s111
      %s114 = sphi 0, %s113
      %s128 = sphi 0, %s114
      %s134 = sphi 0, %s136
      %s137 = sphi 0, %s134
      %s138 = sphi 0, %s137
      %s154 = sphi 0, %s138
    $region4: #{tpu_custom_call.1} parent=1 // loop_header_branch
      %17 = sbr.rel (%p15) target = $region8
    $region5: #{tpu_custom_call.1} parent=1 // loop_body
      %s19 = ssub.s32 %s14, 1
      %s20 = ssub.s32 %s14, 2
      %s21 = sadd.s32 %s14, 1
      %s22 = ssub.s32 %s14, %s21
      %p23 = scmp.eq.s32.totalorder %s22, 0
      %s25 = sadd.s32 %s24, 1
      %s26 = scalar_select %p23, %s24, %s25
      %p29 = pneg %p23
      %p30 = scmp.eq.s32.totalorder %s14, 1
      %p31 = por %p29, %p30
      %p32 = scmp.ne.s32.totalorder %s24, %s27
      %p33 = scmp.eq.s32.totalorder %s14, 0
      %p34 = por %p32, %p33
      %p35 = scmp.ne.s32.totalorder %s24, %s27
      %p36 = scmp.eq.s32.totalorder %s19, 1
      %p37 = por %p35, %p36
      %p38 = scmp.ne.s32.totalorder %s27, %s28
      %p39 = scmp.eq.s32.totalorder %s19, 0
      %p40 = por %p38, %p39
      %p41 = scmp.ne.s32.totalorder %s27, %s28
      %p42 = scmp.eq.s32.totalorder %s20, 1
      %p43 = por %p41, %p42
      %p45 = scmp.ne.s32.totalorder %s28, %s44
      %p46 = scmp.eq.s32.totalorder %s20, 0
      %p47 = por %p45, %p46
      %s49 = sadd.s32 %s48, 1
      %p52 = scmp.eq.s32.totalorder %s14, 1
      %p53 = scmp.ne.s32.totalorder %s48, %s50
      %p54 = scmp.eq.s32.totalorder %s14, 0
      %p55 = por %p53, %p54
      %p56 = scmp.ne.s32.totalorder %s48, %s50
      %p57 = scmp.eq.s32.totalorder %s19, 1
      %p58 = por %p56, %p57
      %p59 = scmp.ne.s32.totalorder %s50, %s51
      %p60 = scmp.eq.s32.totalorder %s19, 0
      %p61 = por %p59, %p60
      %p62 = scmp.ne.s32.totalorder %s50, %s51
      %p63 = scmp.eq.s32.totalorder %s20, 1
      %p64 = por %p62, %p63
      %p66 = scmp.ne.s32.totalorder %s51, %s65
      %p67 = scmp.eq.s32.totalorder %s20, 0
      %p68 = por %p66, %p67
      %s70 = sadd.s32 %s69, 1
      %p73 = scmp.eq.s32.totalorder %s14, 1
      %p74 = scmp.ne.s32.totalorder %s69, %s71
      %p75 = scmp.eq.s32.totalorder %s14, 0
      %p76 = por %p74, %p75
      %p77 = scmp.ne.s32.totalorder %s69, %s71
      %p78 = scmp.eq.s32.totalorder %s19, 1
      %p79 = por %p77, %p78
      %p80 = scmp.ne.s32.totalorder %s71, %s72
      %p81 = scmp.eq.s32.totalorder %s19, 0
      %p82 = por %p80, %p81
      %p83 = scmp.ne.s32.totalorder %s71, %s72
      %p84 = scmp.eq.s32.totalorder %s20, 1
      %p85 = por %p83, %p84
      %p87 = scmp.ne.s32.totalorder %s72, %s86
      %p88 = scmp.eq.s32.totalorder %s20, 0
      %p89 = por %p87, %p88
      %s91 = sadd.s32 %s90, 1
      %p94 = scmp.eq.s32.totalorder %s14, 1
      %p95 = scmp.ne.s32.totalorder %s90, %s92
      %p96 = scmp.eq.s32.totalorder %s14, 0
      %p97 = por %p95, %p96
      %p98 = scmp.ne.s32.totalorder %s90, %s92
      %p99 = scmp.eq.s32.totalorder %s19, 1
      %p100 = por %p98, %p99
      %p101 = scmp.ne.s32.totalorder %s92, %s93
      %p102 = scmp.eq.s32.totalorder %s19, 0
      %p103 = por %p101, %p102
      %p104 = scmp.ne.s32.totalorder %s92, %s93
      %p105 = scmp.eq.s32.totalorder %s20, 1
      %p106 = por %p104, %p105
      %p108 = scmp.ne.s32.totalorder %s93, %s107
      %p109 = scmp.eq.s32.totalorder %s20, 0
      %p110 = por %p108, %p109
      %s112 = sadd.s32 %s111, 1
      %p115 = scmp.eq.s32.totalorder %s14, 1
      %p116 = scmp.ne.s32.totalorder %s111, %s113
      %p117 = scmp.eq.s32.totalorder %s14, 0
      %p118 = por %p116, %p117
      %p119 = scmp.ne.s32.totalorder %s111, %s113
      %p120 = scmp.eq.s32.totalorder %s19, 1
      %p121 = por %p119, %p120
      %p122 = scmp.ne.s32.totalorder %s113, %s114
      %p123 = scmp.eq.s32.totalorder %s19, 0
      %p124 = por %p122, %p123
      %p125 = scmp.ne.s32.totalorder %s113, %s114
      %p126 = scmp.eq.s32.totalorder %s20, 1
      %p127 = por %p125, %p126
      %p129 = scmp.ne.s32.totalorder %s114, %s128
      %p130 = scmp.eq.s32.totalorder %s20, 0
      %p131 = por %p129, %p130
      %s132 = ssub.s32 %s14, %s21
      %p133 = scmp.eq.s32.totalorder %s132, 0
      %s135 = sadd.s32 %s134, 1
      %s136 = scalar_select %p133, %s134, %s135
      %p139 = pneg %p133
      %p140 = scmp.eq.s32.totalorder %s14, 1
      %p141 = por %p139, %p140
      %p142 = scmp.ne.s32.totalorder %s134, %s137
      %p143 = scmp.eq.s32.totalorder %s14, 0
      %p144 = por %p142, %p143
      %p145 = scmp.ne.s32.totalorder %s134, %s137
      %p146 = scmp.eq.s32.totalorder %s19, 1
      %p147 = por %p145, %p146
      %p148 = scmp.ne.s32.totalorder %s137, %s138
      %p149 = scmp.eq.s32.totalorder %s19, 0
      %p150 = por %p148, %p149
      %p151 = scmp.ne.s32.totalorder %s137, %s138
      %p152 = scmp.eq.s32.totalorder %s20, 1
      %p153 = por %p151, %p152
      %p155 = scmp.ne.s32.totalorder %s138, %s154
      %p156 = scmp.eq.s32.totalorder %s20, 0
      %p157 = por %p155, %p156
      %p158 = scmp.le.s32.totalorder 1, %s14
      %p159 = scmp.lt.s32.totalorder %s14, 3
      %p160 = pnand %p158, %p159
      %p161 = pneg %p160
      // Predicated region
      $region9: #{tpu_custom_call.1} parent=5 // pred_check
        _
      $region10: #{tpu_custom_call.1} parent=5 // pred_check_branch
        %163 = sbr.rel (%p160) target = $region12
      $region11: #{tpu_custom_call.1} parent=5 // pred_region
        %s164 = ssub.s32 %s14, 1
        // Predicated region
        $region13: #{tpu_custom_call.1} parent=11 // pred_check
          %p165 = pneg %p61
        $region14: #{tpu_custom_call.1} parent=11 // pred_check_branch
          %167 = sbr.rel (%p165) target = $region16
        $region15: #{tpu_custom_call.1} parent=11 // pred_region
          _
        $region16: #{tpu_custom_call.1} parent=11 // pred_fallthru
          _
        // Predicated region
        $region17: #{tpu_custom_call.1} parent=11 // pred_check
          %p168 = pneg %p82
        $region18: #{tpu_custom_call.1} parent=11 // pred_check_branch
          %170 = sbr.rel (%p168) target = $region20
        $region19: #{tpu_custom_call.1} parent=11 // pred_region
          _
        $region20: #{tpu_custom_call.1} parent=11 // pred_fallthru
          _
        // Predicated region
        $region21: #{tpu_custom_call.1} parent=11 // pred_check
          %p171 = pneg %p103
        $region22: #{tpu_custom_call.1} parent=11 // pred_check_branch
          %173 = sbr.rel (%p171) target = $region24
        $region23: #{tpu_custom_call.1} parent=11 // pred_region
          _
        $region24: #{tpu_custom_call.1} parent=11 // pred_fallthru
          _
        // Predicated region
        $region25: #{tpu_custom_call.1} parent=11 // pred_check
          %p174 = pneg %p124
        $region26: #{tpu_custom_call.1} parent=11 // pred_check_branch
          %176 = sbr.rel (%p174) target = $region28
        $region27: #{tpu_custom_call.1} parent=11 // pred_region
          _
        $region28: #{tpu_custom_call.1} parent=11 // pred_fallthru
          _
      $region12: #{tpu_custom_call.1} parent=5 // pred_fallthru
        _
      %p177 = scmp.lt.s32.totalorder %s14, 2
      // Predicated region
      $region29: #{tpu_custom_call.1} parent=5 // pred_check
        %p178 = pneg %p177
      $region30: #{tpu_custom_call.1} parent=5 // pred_check_branch
        %180 = sbr.rel (%p178) target = $region32
      $region31: #{tpu_custom_call.1} parent=5 // pred_region
        // Predicated region
        $region33: #{tpu_custom_call.1} parent=31 // pred_check
          %p181 = pneg %p34
        $region34: #{tpu_custom_call.1} parent=31 // pred_check_branch
          %183 = sbr.rel (%p181) target = $region36
        $region35: #{tpu_custom_call.1} parent=31 // pred_region
          %p184 = scmp.lt.s32.totalorder %s14, 1
          %s185 = scalar_select %p184, %s14, 1
          %s186 = smul.addr %s185, 2
          %s187 = smul.addr %s186, 4
          %s188 = scalar_lea.vmem %s0, %s187
        $region36: #{tpu_custom_call.1} parent=31 // pred_fallthru
          _
      $region32: #{tpu_custom_call.1} parent=5 // pred_fallthru
        _
      %p189 = scmp.le.s32.totalorder 1, %s14
      %p190 = scmp.lt.s32.totalorder %s14, 3
      %p191 = pnand %p189, %p190
      %p192 = pneg %p191
      // Predicated region
      $region37: #{tpu_custom_call.1} parent=5 // pred_check
        _
      $region38: #{tpu_custom_call.1} parent=5 // pred_check_branch
        %194 = sbr.rel (%p191) target = $region40
      $region39: #{tpu_custom_call.1} parent=5 // pred_region
        %s195 = ssub.s32 %s14, 1
        %p196 = scmp.lt.s32.totalorder %s19, 1
        %s197 = scalar_select %p196, %s19, 1
        %s198 = smul.addr %s197, 2
        %s199 = smul.addr %s198, 4
        %s200 = scalar_lea.vmem %s0, %s199
        %p201 = pneg %p40
        %p202 = pneg %p37
        %p203 = pneg %p61
        %p204 = pneg %p58
        %p205 = pneg %p82
        %p206 = pneg %p79
        %p207 = pneg %p103
        %p208 = pneg %p100
        %p209 = pneg %p124
        %p210 = pneg %p121
        %p211 = pneg %p150
        %p212 = pneg %p147
        %s213 = sand.u32 %s137, 1
        %s214 = scalar_lea.sflag [#allocation3], %s213
        %s215 = sand.u32 %s137, 1
        %s216 = scalar_lea.vmem [#allocation2], %s215
        %p217 = scmp.lt.s32.totalorder %s19, 1
        %s218 = scalar_select %p217, %s19, 1
        %s219 = smul.addr %s218, 2
        %s220 = smul.addr %s219, 4
        %s221 = scalar_lea.vmem %s0, %s220
        %v222 = vld [vmem:[%s221] sm:$0xff]
        %v223 = vld [vmem:[%s1] sm:$0xff]
        %v224 = vld [vmem:[%s1 + $0x8] sm:$0xff]
        %v225 = vld [vmem:[%s1 + $0x10] sm:$0xff]
        %v226 = vld [vmem:[%s1 + $0x18] sm:$0xff]
        %v228 = vcombine.high %v222, %v222
        %vm229 = vcmask 31744
        %v231 = vsel %vm229, %v223, 0
        %v234 = vsel %vm229, %v224, 0
        %v237 = vsel %vm229, %v225, 0
        %v240 = vsel %vm229, %v226, 0
        %vm242 = vcmask 1043456
        %v243 = vsel %vm242, %v222, 0
        %v245 = vsel %vm242, %v228, 0
        %247 = vmatprep.subr.mxu0 %v245
        %248 = vmatpush1.msra.mxu0 %v243
        %249 = vmatprep.subr.mxu0 0.0
        %250 = vmatpush1.msra.mxu0 0.0
        %251 = vmatprep.subr.mxu0 0.0
        %252 = vmatpush1.msra.mxu0 0.0
        %253 = vmatprep.subr.mxu0 0.0
        %254 = vmatpush1.msra.mxu0 0.0
        %255 = vmatprep.subr.mxu0 0.0
        %256 = vmatpush1.msra.mxu0 0.0
        %257 = vmatprep.subr.mxu0 0.0
        %258 = vmatpush1.msra.mxu0 0.0
        %259 = vmatprep.subr.mxu0 0.0
        %260 = vmatpush1.msra.mxu0 0.0
        %261 = vmatprep.subr.mxu0 0.0
        %262 = vmatpush1.msra.mxu0 0.0
        %263 = vmatprep.subr.mxu0 0.0
        %264 = vmatpush1.msra.mxu0 0.0
        %265 = vmatprep.subr.mxu0 0.0
        %266 = vmatpush1.msra.mxu0 0.0
        %267 = vmatprep.subr.mxu0 0.0
        %268 = vmatpush1.msra.mxu0 0.0
        %269 = vmatprep.subr.mxu0 0.0
        %270 = vmatpush1.msra.mxu0 0.0
        %271 = vmatprep.subr.mxu0 0.0
        %272 = vmatpush1.msra.mxu0 0.0
        %273 = vmatprep.subr.mxu0 0.0
        %274 = vmatpush1.msra.mxu0 0.0
        %275 = vmatprep.subr.mxu0 0.0
        %276 = vmatpush1.msra.mxu0 0.0
        %277 = vmatprep.subr.mxu0 0.0
        %278 = vmatpush1.msra.mxu0 0.0
        %279 = vmatprep.subr.mxu0 0.0
        %280 = vmatpush1.msra.mxu0 0.0
        %281 = vmatprep.subr.mxu0 0.0
        %282 = vmatpush1.msra.mxu0 0.0
        %283 = vmatprep.subr.mxu0 0.0
        %284 = vmatpush1.msra.mxu0 0.0
        %285 = vmatprep.subr.mxu0 0.0
        %286 = vmatpush1.msra.mxu0 0.0
        %287 = vmatprep.subr.mxu0 0.0
        %288 = vmatpush1.msra.mxu0 0.0
        %289 = vmatprep.subr.mxu0 0.0
        %290 = vmatpush1.msra.mxu0 0.0
        %291 = vmatprep.subr.mxu0 0.0
        %292 = vmatpush1.msra.mxu0 0.0
        %293 = vmatprep.subr.mxu0 0.0
        %294 = vmatpush1.msra.mxu0 0.0
        %295 = vmatprep.subr.mxu0 0.0
        %296 = vmatpush1.msra.mxu0 0.0
        %297 = vmatprep.subr.mxu0 0.0
        %298 = vmatpush1.msra.mxu0 0.0
        %299 = vmatprep.subr.mxu0 0.0
        %300 = vmatpush1.msra.mxu0 0.0
        %301 = vmatprep.subr.mxu0 0.0
        %302 = vmatpush1.msra.mxu0 0.0
        %303 = vmatprep.subr.mxu0 0.0
        %304 = vmatpush1.msra.mxu0 0.0
        %305 = vmatprep.subr.mxu0 0.0
        %306 = vmatpush1.msra.mxu0 0.0
        %307 = vmatprep.subr.mxu0 0.0
        %308 = vmatpush1.msra.mxu0 0.0
        %309 = vmatprep.subr.mxu0 0.0
        %310 = vmatpush1.msra.mxu0 0.0
        %311 = vmatprep.mubr.f32.mxu0 0.0
        %312 = vmatmul.mubr.f32.gmra.mrb[0].mxu0 %v231
        %v313 = vpop.f32.mrb[0].mxu0
        %v314 = vadd.f32 0.0, %v313
        %v315 = vpop.f32.mrb[0].mxu0
        %v316 = vadd.f32 0.0, %v315
        %317 = vmatprep.mubr.f32.mxu0 0.0
        %318 = vmatmul.mubr.f32.gmra.mrb[0].mxu0 %v234
        %v319 = vpop.f32.mrb[0].mxu0
        %v320 = vadd.f32 0.0, %v319
        %v321 = vpop.f32.mrb[0].mxu0
        %v322 = vadd.f32 0.0, %v321
        %323 = vmatprep.mubr.f32.mxu0 0.0
        %324 = vmatmul.mubr.f32.gmra.mrb[0].mxu0 %v237
        %v325 = vpop.f32.mrb[0].mxu0
        %v326 = vadd.f32 0.0, %v325
        %v327 = vpop.f32.mrb[0].mxu0
        %v328 = vadd.f32 0.0, %v327
        %329 = vmatprep.mubr.f32.mxu0 0.0
        %330 = vmatmul.mubr.f32.gmra.mrb[0].mxu0 %v240
        %v331 = vpop.f32.mrb[0].mxu0
        %v332 = vadd.f32 0.0, %v331
        %v333 = vpop.f32.mrb[0].mxu0
        %v334 = vadd.f32 0.0, %v333
        %335 = vdwg.mxu0
        %v336 = vmax.f32 %v314, 0.0
        %v337 = vmax.f32 %v316, 0.0
        %v338 = vmax.f32 %v320, 0.0
        %v339 = vmax.f32 %v322, 0.0
        %v340 = vmax.f32 %v326, 0.0
        %v341 = vmax.f32 %v328, 0.0
        %v342 = vmax.f32 %v332, 0.0
        %v343 = vmax.f32 %v334, 0.0
        %v344 = vld [vmem:[%s2] sm:$0xff]
        %v345 = vld [vmem:[%s2 + $0x8] sm:$0xff]
        %v346 = vld [vmem:[%s2 + $0x10] sm:$0xff]
        %v347 = vld [vmem:[%s2 + $0x18] sm:$0xff]
        %v348 = vld [vmem:[%s2 + $0x20] sm:$0xff]
        %v349 = vld [vmem:[%s2 + $0x28] sm:$0xff]
        %v350 = vld [vmem:[%s2 + $0x30] sm:$0xff]
        %v351 = vld [vmem:[%s2 + $0x38] sm:$0xff]
        %v352 = vld [vmem:[%s2 + $0x40] sm:$0xff]
        %v353 = vld [vmem:[%s2 + $0x48] sm:$0xff]
        %v354 = vld [vmem:[%s2 + $0x50] sm:$0xff]
        %v355 = vld [vmem:[%s2 + $0x58] sm:$0xff]
        %v356 = vld [vmem:[%s2 + $0x60] sm:$0xff]
        %v357 = vld [vmem:[%s2 + $0x68] sm:$0xff]
        %v358 = vld [vmem:[%s2 + $0x70] sm:$0xff]
        %v359 = vld [vmem:[%s2 + $0x78] sm:$0xff]
        %v360 = vld [vmem:[%s2 + $0x80] sm:$0xff]
        %v361 = vld [vmem:[%s2 + $0x88] sm:$0xff]
        %v362 = vld [vmem:[%s2 + $0x90] sm:$0xff]
        %v363 = vld [vmem:[%s2 + $0x98] sm:$0xff]
        %v364 = vld [vmem:[%s2 + $0xa0] sm:$0xff]
        %v365 = vld [vmem:[%s2 + $0xa8] sm:$0xff]
        %v366 = vld [vmem:[%s2 + $0xb0] sm:$0xff]
        %v367 = vld [vmem:[%s2 + $0xb8] sm:$0xff]
        %v368 = vld [vmem:[%s2 + $0xc0] sm:$0xff]
        %v369 = vld [vmem:[%s2 + $0xc8] sm:$0xff]
        %v370 = vld [vmem:[%s2 + $0xd0] sm:$0xff]
        %v371 = vld [vmem:[%s2 + $0xd8] sm:$0xff]
        %v372 = vld [vmem:[%s2 + $0xe0] sm:$0xff]
        %v373 = vld [vmem:[%s2 + $0xe8] sm:$0xff]
        %v374 = vld [vmem:[%s2 + $0xf0] sm:$0xff]
        %v375 = vld [vmem:[%s2 + $0xf8] sm:$0xff]
        %376 = vmatprep.subr.mxu0 0.0
        %377 = vmatpush1.msra.mxu0 %v344
        %378 = vmatprep.subr.mxu0 0.0
        %379 = vmatpush1.msra.mxu0 %v345
        %380 = vmatprep.subr.mxu0 0.0
        %381 = vmatpush1.msra.mxu0 %v346
        %382 = vmatprep.subr.mxu0 0.0
        %383 = vmatpush1.msra.mxu0 %v347
        %384 = vmatprep.subr.mxu0 0.0
        %385 = vmatpush1.msra.mxu0 %v348
        %386 = vmatprep.subr.mxu0 0.0
        %387 = vmatpush1.msra.mxu0 %v349
        %388 = vmatprep.subr.mxu0 0.0
        %389 = vmatpush1.msra.mxu0 %v350
        %390 = vmatprep.subr.mxu0 0.0
        %391 = vmatpush1.msra.mxu0 %v351
        %392 = vmatprep.subr.mxu0 0.0
        %393 = vmatpush1.msra.mxu0 %v352
        %394 = vmatprep.subr.mxu0 0.0
        %395 = vmatpush1.msra.mxu0 %v353
        %396 = vmatprep.subr.mxu0 0.0
        %397 = vmatpush1.msra.mxu0 %v354
        %398 = vmatprep.subr.mxu0 0.0
        %399 = vmatpush1.msra.mxu0 %v355
        %400 = vmatprep.subr.mxu0 0.0
        %401 = vmatpush1.msra.mxu0 %v356
        %402 = vmatprep.subr.mxu0 0.0
        %403 = vmatpush1.msra.mxu0 %v357
        %404 = vmatprep.subr.mxu0 0.0
        %405 = vmatpush1.msra.mxu0 %v358
        %406 = vmatprep.subr.mxu0 0.0
        %407 = vmatpush1.msra.mxu0 %v359
        %408 = vmatprep.subr.mxu0 0.0
        %409 = vmatpush1.msra.mxu0 %v360
        %410 = vmatprep.subr.mxu0 0.0
        %411 = vmatpush1.msra.mxu0 %v361
        %412 = vmatprep.subr.mxu0 0.0
        %413 = vmatpush1.msra.mxu0 %v362
        %414 = vmatprep.subr.mxu0 0.0
        %415 = vmatpush1.msra.mxu0 %v363
        %416 = vmatprep.subr.mxu0 0.0
        %417 = vmatpush1.msra.mxu0 %v364
        %418 = vmatprep.subr.mxu0 0.0
        %419 = vmatpush1.msra.mxu0 %v365
        %420 = vmatprep.subr.mxu0 0.0
        %421 = vmatpush1.msra.mxu0 %v366
        %422 = vmatprep.subr.mxu0 0.0
        %423 = vmatpush1.msra.mxu0 %v367
        %424 = vmatprep.subr.mxu0 0.0
        %425 = vmatpush1.msra.mxu0 %v368
        %426 = vmatprep.subr.mxu0 0.0
        %427 = vmatpush1.msra.mxu0 %v369
        %428 = vmatprep.subr.mxu0 0.0
        %429 = vmatpush1.msra.mxu0 %v370
        %430 = vmatprep.subr.mxu0 0.0
        %431 = vmatpush1.msra.mxu0 %v371
        %432 = vmatprep.subr.mxu0 0.0
        %433 = vmatpush1.msra.mxu0 %v372
        %434 = vmatprep.subr.mxu0 0.0
        %435 = vmatpush1.msra.mxu0 %v373
        %436 = vmatprep.subr.mxu0 0.0
        %437 = vmatpush1.msra.mxu0 %v374
        %438 = vmatprep.subr.mxu0 0.0
        %439 = vmatpush1.msra.mxu0 %v375
        %440 = vmatprep.mubr.f32.mxu0 %v337
        %441 = vmatmul.mubr.f32.gmra.mrb[0].mxu0 %v336
        %v442 = vpop.f32.mrb[0].mxu0
        %v443 = vadd.f32 0.0, %v442
        %v444 = vpop.f32.mrb[0].mxu0
        %445 = vmatprep.mubr.f32.mxu0 %v339
        %446 = vmatmul.mubr.f32.gmra.mrb[0].mxu0 %v338
        %v447 = vpop.f32.mrb[0].mxu0
        %v448 = vadd.f32 0.0, %v447
        %v449 = vpop.f32.mrb[0].mxu0
        %450 = vmatprep.mubr.f32.mxu0 %v341
        %451 = vmatmul.mubr.f32.gmra.mrb[0].mxu0 %v340
        %v452 = vpop.f32.mrb[0].mxu0
        %v453 = vadd.f32 0.0, %v452
        %v454 = vpop.f32.mrb[0].mxu0
        %455 = vmatprep.mubr.f32.mxu0 %v343
        %456 = vmatmul.mubr.f32.gmra.mrb[0].mxu0 %v342
        %v457 = vpop.f32.mrb[0].mxu0
        %v458 = vadd.f32 0.0, %v457
        %v459 = vpop.f32.mrb[0].mxu0
        %460 = vdwg.mxu0
        %v461 = vld [vmem:[%s3] sm:$0xff]
        %v462 = vld [vmem:[%s4] sm:$0xff]
        %vm463 = vcmask 261120
        %v465 = vsel %vm463, %v461, 0
        %467 = vmatprep.subr.mxu0 0.0
        %468 = vmatpush1.msra.mxu0 %v443
        %469 = vmatprep.subr.mxu0 0.0
        %470 = vmatpush1.msra.mxu0 %v448
        %471 = vmatprep.subr.mxu0 0.0
        %472 = vmatpush1.msra.mxu0 %v453
        %473 = vmatprep.subr.mxu0 0.0
        %474 = vmatpush1.msra.mxu0 %v458
        %475 = vmatprep.subr.mxu0 0.0
        %476 = vmatpush1.msra.mxu0 0.0
        %477 = vmatprep.subr.mxu0 0.0
        %478 = vmatpush1.msra.mxu0 0.0
        %479 = vmatprep.subr.mxu0 0.0
        %480 = vmatpush1.msra.mxu0 0.0
        %481 = vmatprep.subr.mxu0 0.0
        %482 = vmatpush1.msra.mxu0 0.0
        %483 = vmatprep.subr.mxu0 0.0
        %484 = vmatpush1.msra.mxu0 0.0
        %485 = vmatprep.subr.mxu0 0.0
        %486 = vmatpush1.msra.mxu0 0.0
        %487 = vmatprep.subr.mxu0 0.0
        %488 = vmatpush1.msra.mxu0 0.0
        %489 = vmatprep.subr.mxu0 0.0
        %490 = vmatpush1.msra.mxu0 0.0
        %491 = vmatprep.subr.mxu0 0.0
        %492 = vmatpush1.msra.mxu0 0.0
        %493 = vmatprep.subr.mxu0 0.0
        %494 = vmatpush1.msra.mxu0 0.0
        %495 = vmatprep.subr.mxu0 0.0
        %496 = vmatpush1.msra.mxu0 0.0
        %497 = vmatprep.subr.mxu0 0.0
        %498 = vmatpush1.msra.mxu0 0.0
        %499 = vmatprep.subr.mxu0 0.0
        %500 = vmatpush1.msra.mxu0 0.0
        %501 = vmatprep.subr.mxu0 0.0
        %502 = vmatpush1.msra.mxu0 0.0
        %503 = vmatprep.subr.mxu0 0.0
        %504 = vmatpush1.msra.mxu0 0.0
        %505 = vmatprep.subr.mxu0 0.0
        %506 = vmatpush1.msra.mxu0 0.0
        %507 = vmatprep.subr.mxu0 0.0
        %508 = vmatpush1.msra.mxu0 0.0
        %509 = vmatprep.subr.mxu0 0.0
        %510 = vmatpush1.msra.mxu0 0.0
        %511 = vmatprep.subr.mxu0 0.0
        %512 = vmatpush1.msra.mxu0 0.0
        %513 = vmatprep.subr.mxu0 0.0
        %514 = vmatpush1.msra.mxu0 0.0
        %515 = vmatprep.subr.mxu0 0.0
        %516 = vmatpush1.msra.mxu0 0.0
        %517 = vmatprep.subr.mxu0 0.0
        %518 = vmatpush1.msra.mxu0 0.0
        %519 = vmatprep.subr.mxu0 0.0
        %520 = vmatpush1.msra.mxu0 0.0
        %521 = vmatprep.subr.mxu0 0.0
        %522 = vmatpush1.msra.mxu0 0.0
        %523 = vmatprep.subr.mxu0 0.0
        %524 = vmatpush1.msra.mxu0 0.0
        %525 = vmatprep.subr.mxu0 0.0
        %526 = vmatpush1.msra.mxu0 0.0
        %527 = vmatprep.subr.mxu0 0.0
        %528 = vmatpush1.msra.mxu0 0.0
        %529 = vmatprep.subr.mxu0 0.0
        %530 = vmatpush1.msra.mxu0 0.0
        %531 = vmatprep.mubr.f32.mxu0 0.0
        %532 = vmatmul.mubr.f32.gmra.mrb[0].mxu0 %v465
        %v533 = vpop.f32.mrb[0].mxu0
        %v534 = vadd.f32 %v462, %v533
        %v535 = vpop.f32.mrb[0].mxu0
        %536 = vdwg.mxu0
        %v537 = vlaneseq
        %v538 = vshrl.u32 %v537, 7
        %vm539 = vcmp.ge.s32.totalorder %v538, 0
        %vm540 = vcmp.lt.s32.totalorder %v538, 4
        %vm541 = vmand %vm539, %vm540
        %v542 = vsel %vm541, %v534, -1e+30
        %vm543 = vcmask 7168
        %v544 = vsel %vm543, %v542, -inf
        %v545 = vrot.slane %v544, 4
        %v546 = vmax.f32 %v544, %v545
        %v547 = vrot.slane %v546, 2
        %v548 = vmax.f32 %v546, %v547
        %v549 = vrot.slane %v548, 1
        %v550 = vmax.f32 %v548, %v549
        %vm551 = vcmp.ge.s32.totalorder %v538, 4
        %vm552 = vcmp.lt.s32.totalorder %v538, 8
        %vm553 = vmand %vm551, %vm552
        %v554 = vsel %vm553, %v534, -1e+30
        %v555 = vsel %vm543, %v554, -inf
        %v556 = vrot.slane %v555, 4
        %v557 = vmax.f32 %v555, %v556
        %v558 = vrot.slane %v557, 2
        %v559 = vmax.f32 %v557, %v558
        %v560 = vrot.slane %v559, 1
        %v561 = vmax.f32 %v559, %v560
        %vm562 = vcmp.gt.f32.partialorder %v561, %v550
        %v563 = vsel %vm562, 1, 0
        %v564 = vmul.u32 %v563, 4
        %v565 = vadd.s32 %v564, 2
        %v566 = vadd.s32 %v564, 4
        %vm567 = vcmp.ge.s32.totalorder %v538, %v564
        %vm568 = vcmp.lt.s32.totalorder %v538, %v565
        %vm569 = vmand %vm567, %vm568
        %v570 = vsel %vm569, %v534, -1e+30
        %v571 = vsel %vm543, %v570, -inf
        %v572 = vrot.slane %v571, 4
        %v573 = vmax.f32 %v571, %v572
        %v574 = vrot.slane %v573, 2
        %v575 = vmax.f32 %v573, %v574
        %v576 = vrot.slane %v575, 1
        %v577 = vmax.f32 %v575, %v576
        %vm578 = vcmp.ge.s32.totalorder %v538, %v565
        %vm579 = vcmp.lt.s32.totalorder %v538, %v566
        %vm580 = vmand %vm578, %vm579
        %v581 = vsel %vm580, %v534, -1e+30
        %v582 = vsel %vm543, %v581, -inf
        %v583 = vrot.slane %v582, 4
        %v584 = vmax.f32 %v582, %v583
        %v585 = vrot.slane %v584, 2
        %v586 = vmax.f32 %v584, %v585
        %v587 = vrot.slane %v586, 1
        %v588 = vmax.f32 %v586, %v587
        %vm589 = vcmp.gt.f32.partialorder %v588, %v577
        %v590 = vsel %vm589, 1, 0
        %v591 = vmul.u32 %v590, 2
        %v592 = vadd.s32 %v564, %v591
        %v593 = vadd.s32 %v592, 1
        %v594 = vadd.s32 %v592, 2
        %vm595 = vcmp.ge.s32.totalorder %v538, %v592
        %vm596 = vcmp.lt.s32.totalorder %v538, %v593
        %vm597 = vmand %vm595, %vm596
        %v598 = vsel %vm597, %v534, -1e+30
        %v599 = vsel %vm543, %v598, -inf
        %v600 = vrot.slane %v599, 4
        %v601 = vmax.f32 %v599, %v600
        %v602 = vrot.slane %v601, 2
        %v603 = vmax.f32 %v601, %v602
        %v604 = vrot.slane %v603, 1
        %v605 = vmax.f32 %v603, %v604
        %vm606 = vcmp.ge.s32.totalorder %v538, %v593
        %vm607 = vcmp.lt.s32.totalorder %v538, %v594
        %vm608 = vmand %vm606, %vm607
        %v609 = vsel %vm608, %v534, -1e+30
        %v610 = vsel %vm543, %v609, -inf
        %v611 = vrot.slane %v610, 4
        %v612 = vmax.f32 %v610, %v611
        %v613 = vrot.slane %v612, 2
        %v614 = vmax.f32 %v612, %v613
        %v615 = vrot.slane %v614, 1
        %v616 = vmax.f32 %v614, %v615
        %vm617 = vcmp.gt.f32.partialorder %v616, %v605
        %v618 = vsel %vm617, 1, 0
        %v619 = vadd.s32 %v592, %v618
        %v620 = vlaneseq
        %v621 = vand.u32 %v620, 127
        %622 = vset.pattern.permute.xlu0 0
        %623 = vperm.xlu0 %622, %v619
        %v624 = vpop.permute.xlu0 %623
        %vm625 = vcmp.eq.s32.totalorder %v621, %v624
        %v626 = vsel %vm625, 1, 0
        %v627 = vcvt.s32.f32 %v626
        %628 = vst [vmem:[%s216] sm:$0x1] %v627
        %s629 = sand.u32 %s137, 1
        %s630 = scalar_lea.sflag [#allocation3], %s629
        %s631 = sand.u32 %s137, 1
        %s632 = scalar_lea.vmem [#allocation2], %s631
        // Predicated region
        $region41: #{tpu_custom_call.1} parent=39 // pred_check
          %p633 = pneg %p147
        $region42: #{tpu_custom_call.1} parent=39 // pred_check_branch
          %635 = sbr.rel (%p633) target = $region44
        $region43: #{tpu_custom_call.1} parent=39 // pred_region
          %s637 = ssub.s32 16, 16
          %638 = vsyncadd %s630, %s637
          %s639 = smul.addr %s19, 16
          %s640 = scalar_lea.hbm %s5, %s639
          %s642 = sshll.u32 %s632, 4
          %s643 = int_to_ptr.vmem [resolvable:$true] %s642
          %645 = dma.vmem_to_hbm [thread:$0]  %s643, 16, %s640, %s630
        $region44: #{tpu_custom_call.1} parent=39 // pred_fallthru
          _
      $region40: #{tpu_custom_call.1} parent=5 // pred_fallthru
        _
      %p646 = scmp.le.s32.totalorder 2, %s14
      // Predicated region
      $region45: #{tpu_custom_call.1} parent=5 // pred_check
        %p647 = pneg %p646
      $region46: #{tpu_custom_call.1} parent=5 // pred_check_branch
        %649 = sbr.rel (%p647) target = $region48
      $region47: #{tpu_custom_call.1} parent=5 // pred_region
        %s650 = ssub.s32 %s14, 2
        // Predicated region
        $region49: #{tpu_custom_call.1} parent=47 // pred_check
          %p651 = pneg %p153
        $region50: #{tpu_custom_call.1} parent=47 // pred_check_branch
          %653 = sbr.rel (%p651) target = $region52
        $region51: #{tpu_custom_call.1} parent=47 // pred_region
          %s654 = sand.u32 %s138, 1
          %s655 = scalar_lea.sflag [#allocation3], %s654
          %s656 = sand.u32 %s138, 1
          %s657 = scalar_lea.vmem [#allocation2], %s656
          %658 = dma.done %s655, 16
        $region52: #{tpu_custom_call.1} parent=47 // pred_fallthru
          _
      $region48: #{tpu_custom_call.1} parent=5 // pred_fallthru
        _
    $region6: #{tpu_custom_call.1} parent=1 // loop_footer
      %s18 = sadd.s32 1, %s14
    $region7: #{tpu_custom_call.1} parent=1 // loop_footer_branch
      %13 = sbr.rel target = $region3
    $region8: #{tpu_custom_call.1} parent=1 // loop_exit
      _
    %659 = vsyncpa [#allocation3], 1
    %s660 = scalar_lea.sflag [#allocation3], 1
    %661 = vsyncpa %s660, 1

</llo_original>
